<compile_context>
chip_gen: v7x
topology: tpu7x:2x2x1
jax: 0.10.0
libtpu: 0.0.40
codegen_flags: <defaults>
</compile_context>

<pallas_src>
import functools

import jax
import jax.numpy as jnp
import numpy as np
from jax.experimental import pallas as pl
from jax.experimental.pallas import tpu as pltpu


def _osl_kernel(*refs, min_mag, tile_n, chunk, has_weights):
    """Row-block kernel: per-sample objectosphere loss, lane-dense epilogue.

    refs (has_weights=True):  feat (tile_n, d), tgt (1, tile_n) i32,
                              w (1, tile_n) f32, out (1, tile_n) f32
    refs (has_weights=False): feat, tgt, out
    """
    if has_weights:
        feat_ref, tgt_ref, w_ref, out_ref = refs
    else:
        feat_ref, tgt_ref, out_ref = refs
        w_ref = None

    d = feat_ref.shape[1]
    # LHS of the reduction matmul: 8 identical rows of ones (M=8 keeps the MXU
    # on its native sublane granularity; all 8 result rows are identical).
    ones_lhs = jnp.ones((8, d), dtype=jnp.float32)
    # Contract lhs dim 1 with rhs dim 1 (A @ B^T) -> result is (8, rows),
    # i.e. the per-row sums land lane-major with no XLU transpose needed.
    dims = (((1,), (1,)), ((), ()))

    # Static in-kernel loop: big DMA block, bounded-size compute chunks.
    for off in range(0, tile_n, chunk):
        rows = min(chunk, tile_n - off)

        f = feat_ref[pl.ds(off, rows), :].astype(jnp.float32)      # (rows, d)
        sq = f * f
        acc = jax.lax.dot_general(ones_lhs, sq, dims,
                                  preferred_element_type=jnp.float32)
        magsq = acc[0:1, :]                                         # (1, rows)

        mag = jnp.sqrt(magsq)
        gap = jnp.maximum(min_mag - mag, 0.0)
        tgt = tgt_ref[:, pl.ds(off, rows)]                          # (1, rows)
        # known (target >= 0): clamp(min_mag - mag, 0)^2 ; unknown: mag^2
        loss = jnp.where(tgt >= 0, gap * gap, magsq)
        if has_weights:
            loss = loss * w_ref[:, pl.ds(off, rows)]

        out_ref[:, pl.ds(off, rows)] = loss


def objectosphere_loss(features, targets, sample_weights=None,
                       min_magnitude: float = 10.0, reduction: str = "mean"):
    """JAX/Pallas equivalent of ObjectoSphereLoss.forward."""
    n, d = features.shape
    itemsize = jnp.dtype(features.dtype).itemsize

    # In-kernel compute chunk: ~128 KiB of f32 per chunk; rows are a multiple
    # of 128 so the lane-dense epilogue slices stay aligned.
    chunk = (32768 // max(d, 1)) // 128 * 128
    chunk = int(max(128, min(1024, chunk)))

    # Grid block: ~4 MiB of native-dtype feature rows, a multiple of `chunk`,
    # capped at 32768 rows (bounds the unrolled chunk loop).
    target_bytes = 4 * 1024 * 1024
    tile_n = (target_bytes // max(d * itemsize, 1)) // chunk * chunk
    tile_n = int(max(chunk, min(tile_n, 32768)))
    # Keep >= 2 grid steps when possible so the "parallel" row axis can shard
    # across both TensorCores on v7x.
    if n >= 2 * chunk:
        half = ((n + 1) // 2 + chunk - 1) // chunk * chunk
        tile_n = min(tile_n, half)
    if tile_n >= n:
        tile_n = n                     # single block: exact, untiled shapes
    grid_n = (n + tile_n - 1) // tile_n

    # Lane-dense side arrays: (1, n) so their blocks are dense in the lanes.
    tgt_row = targets.astype(jnp.int32).reshape(1, n)
    has_w = sample_weights is not None

    inputs = [features, tgt_row]                    # features streamed natively
    in_specs = [
        pl.BlockSpec((tile_n, d), lambda i: (i, 0)),
        pl.BlockSpec((1, tile_n), lambda i: (0, i)),
    ]
    if has_w:
        inputs.append(sample_weights.astype(jnp.float32).reshape(1, n))
        in_specs.append(pl.BlockSpec((1, tile_n), lambda i: (0, i)))

    per = pl.pallas_call(
        functools.partial(_osl_kernel, min_mag=float(min_magnitude),
                          tile_n=tile_n, chunk=chunk, has_weights=has_w),
        out_shape=jax.ShapeDtypeStruct((1, n), jnp.float32),
        grid=(grid_n,),
        in_specs=in_specs,
        out_specs=pl.BlockSpec((1, tile_n), lambda i: (0, i)),
        compiler_params=pltpu.CompilerParams(
            dimension_semantics=("parallel",),
            vmem_limit_bytes=32 * 1024 * 1024),
    )(*inputs)

    if reduction == "mean":
        return jnp.sum(per) / jnp.float32(n)
    elif reduction == "sum":
        return jnp.sum(per)
    else:  # 'none'
        return per.reshape(n)


def _reference(features, targets, sample_weights=None,
               min_magnitude=10.0, reduction="mean"):
    mag = jnp.linalg.norm(features.astype(jnp.float32), axis=1)
    ring = jnp.maximum(min_magnitude - mag, 0.0)
    loss = jnp.where(targets >= 0, ring, mag) ** 2
    if sample_weights is not None:
        loss = sample_weights.astype(jnp.float32) * loss
    if reduction == "mean":
        return loss.mean()
    if reduction == "sum":
        return loss.sum()
    return loss


if __name__ == "__main__":
    key = jax.random.PRNGKey(0)
    kf, kt, kw, kf2, kt2, kw2, kf4, kt4, kw4 = jax.random.split(key, 9)

    # Tolerance note: the per-row sum of squares is computed on the MXU; f32
    # operands may be pass-split differently across TPU generations, so we
    # allow a small relative slack on top of exact-f32 agreement.
    RTOL, ATOL = 2e-3, 5e-3

    # --- case 1: aligned small shape, f32 -----------------------------------
    N, D = 8, 32
    features = jax.random.normal(kf, (N, D), dtype=jnp.float32) * 5.0
    targets = jax.random.randint(kt, (N,), minval=-1, maxval=4, dtype=jnp.int32)
    sample_weights = jax.random.uniform(kw, (N,), dtype=jnp.float32) + 0.5

    out_mean = objectosphere_loss(features, targets)
    jax.block_until_ready(out_mean)
    np.testing.assert_allclose(np.asarray(out_mean),
                               np.asarray(_reference(features, targets)),
                               rtol=RTOL, atol=ATOL)

    out_sum = objectosphere_loss(features, targets, sample_weights,
                                 reduction="sum")
    jax.block_until_ready(out_sum)
    np.testing.assert_allclose(
        np.asarray(out_sum),
        np.asarray(_reference(features, targets, sample_weights,
                              reduction="sum")),
        rtol=RTOL, atol=ATOL)

    out_none = objectosphere_loss(features, targets, reduction="none")
    jax.block_until_ready(out_none)
    np.testing.assert_allclose(
        np.asarray(out_none),
        np.asarray(_reference(features, targets, reduction="none")),
        rtol=RTOL, atol=ATOL)

    # --- case 2: unaligned rows / odd feature dim (single ragged block) ------
    N2, D2 = 13, 20
    features2 = jax.random.normal(kf2, (N2, D2), dtype=jnp.float32) * 4.0
    targets2 = jax.random.randint(kt2, (N2,), minval=-2, maxval=3,
                                  dtype=jnp.int32)
    weights2 = jax.random.uniform(kw2, (N2,), dtype=jnp.float32) + 0.25

    out2 = objectosphere_loss(features2, targets2, weights2, reduction="mean")
    jax.block_until_ready(out2)
    np.testing.assert_allclose(
        np.asarray(out2),
        np.asarray(_reference(features2, targets2, weights2,
                              reduction="mean")),
        rtol=RTOL, atol=ATOL)

    # --- case 3: native bf16 features (cast happens inside the kernel) -------
    features3 = features2.astype(jnp.bfloat16)
    out3 = objectosphere_loss(features3, targets2, reduction="sum")
    jax.block_until_ready(out3)
    np.testing.assert_allclose(
        np.asarray(out3),
        np.asarray(_reference(features3, targets2, reduction="sum")),
        rtol=RTOL, atol=ATOL)

    # --- case 4: multi-block grid + tail (exercises chunk loop, OOB discard) -
    N4, D4 = 2600, 32
    features4 = jax.random.normal(kf4, (N4, D4), dtype=jnp.float32) * 3.0
    targets4 = jax.random.randint(kt4, (N4,), minval=-2, maxval=4,
                                  dtype=jnp.int32)
    weights4 = jax.random.uniform(kw4, (N4,), dtype=jnp.float32) + 0.5

    out4_mean = objectosphere_loss(features4, targets4, weights4,
                                   reduction="mean")
    jax.block_until_ready(out4_mean)
    np.testing.assert_allclose(
        np.asarray(out4_mean),
        np.asarray(_reference(features4, targets4, weights4,
                              reduction="mean")),
        rtol=RTOL, atol=ATOL)

    out4_none = objectosphere_loss(features4, targets4, reduction="none")
    jax.block_until_ready(out4_none)
    np.testing.assert_allclose(
        np.asarray(out4_none),
        np.asarray(_reference(features4, targets4, reduction="none")),
        rtol=RTOL, atol=ATOL)

    print("KERNEL_OK")
</pallas_src>

<mosaic_0001>
module attributes {stable_mosaic.version = 11 : i64} {
  func.func @_osl_kernel(%arg0: i32, %arg1: memref<8x32xf32, #tpu.memory_space<vmem>>, %arg2: memref<1x8xi32, #tpu.memory_space<vmem>>, %arg3: memref<1x8xf32, #tpu.memory_space<vmem>>) attributes {dimension_semantics = [#tpu.dimension_semantics<parallel>], iteration_bounds = array<i64: 1>, scalar_prefetch = 0 : i64, scratch_operands = 0 : i64, tpu.core_type = #tpu.core_type<tc>, window_params = [{transform_indices = @transform_0, window_bounds = array<i64: 8, 32>}, {transform_indices = @transform_1, window_bounds = array<i64: 1, 8>}, {transform_indices = @transform_2, window_bounds = array<i64: 1, 8>}]} {
    %cst = arith.constant 1.000000e+00 : f32
    %0 = vector.broadcast %cst : f32 to vector<8x32xf32>
    %c0 = arith.constant 0 : index
    %c0_0 = arith.constant 0 : index
    %1 = vector.load %arg1[%c0, %c0_0] : memref<8x32xf32, #tpu.memory_space<vmem>>, vector<8x32xf32>
    %2 = arith.mulf %1, %1 : vector<8x32xf32>
    %cst_1 = arith.constant dense<0.000000e+00> : vector<8x8xf32>
    %3 = tpu.matmul %0, %2, %cst_1 {dimension_numbers = #tpu.dot_dimension_numbers<[1], [1], [0], [0], [0, 0, 1, 0], [], []>} : vector<8x32xf32>, vector<8x32xf32>, vector<8x8xf32> -> vector<8x8xf32>
    %4 = vector.extract_strided_slice %3 {offsets = [0, 0], sizes = [1, 8], strides = [1, 1]} : vector<8x8xf32> to vector<1x8xf32>
    %5 = math.sqrt %4 : vector<1x8xf32>
    %cst_2 = arith.constant 1.000000e+01 : f32
    %6 = vector.broadcast %cst_2 : f32 to vector<1x8xf32>
    %7 = arith.subf %6, %5 : vector<1x8xf32>
    %cst_3 = arith.constant 0.000000e+00 : f32
    %8 = vector.broadcast %cst_3 : f32 to vector<1x8xf32>
    %9 = arith.maximumf %7, %8 : vector<1x8xf32>
    %c0_4 = arith.constant 0 : index
    %c0_5 = arith.constant 0 : index
    %10 = vector.load %arg2[%c0_4, %c0_5] : memref<1x8xi32, #tpu.memory_space<vmem>>, vector<1x8xi32>
    %c0_i32 = arith.constant 0 : i32
    %11 = vector.broadcast %c0_i32 : i32 to vector<1x8xi32>
    %12 = arith.cmpi sge, %10, %11 : vector<1x8xi32>
    %13 = arith.mulf %9, %9 : vector<1x8xf32>
    %14 = arith.select %12, %13, %4 : vector<1x8xi1>, vector<1x8xf32>
    %c0_6 = arith.constant 0 : index
    %c0_7 = arith.constant 0 : index
    %15 = vector.load %arg3[%c0_6, %c0_7] : memref<1x8xf32, #tpu.memory_space<vmem>>, vector<1x8xf32>
    tpu.vector_store %arg3[%c0_6, %c0_7], %14 {strides = array<i32>} : memref<1x8xf32, #tpu.memory_space<vmem>>, vector<1x8xf32>,
    return
  }
  func.func @transform_0(%arg0: i32) -> (i32, i32) {
    %c0_i32 = arith.constant 0 : i32
    %c0_i32_0 = arith.constant 0 : i32
    return %arg0, %c0_i32 : i32, i32
  }
  func.func @transform_1(%arg0: i32) -> (i32, i32) {
    %c0_i32 = arith.constant 0 : i32
    %c0_i32_0 = arith.constant 0 : i32
    return %c0_i32, %arg0 : i32, i32
  }
  func.func @transform_2(%arg0: i32) -> (i32, i32) {
    %c0_i32 = arith.constant 0 : i32
    %c0_i32_0 = arith.constant 0 : i32
    return %c0_i32, %arg0 : i32, i32
  }
}

</mosaic_0001>

<llo_original>
// kernel: tpu_custom_call.1
$region0: #{tpu_custom_call.1}
  #allocation0 [shape = 'u32[]', space=smem, size = 0x4, offset = 0x4, fixed_abs, tag = 'smem constant byte address 0x4 - core index']
  #allocation1 [shape = 'u32[144,128]{1,0:T(1,128)}', space=vmem, size = 0x12000, scoped, tag = 'internal scratch']
  %s0 = inlined_call_operand.hbm [shape: f32[8,32], index: 0, kind: input, shape index: {}]
  %s1 = inlined_call_operand.vmem [shape: s32[1,8], index: 1, kind: input, shape index: {}]
  %s2 = inlined_call_operand.hbm [shape: f32[1,8], index: 2, kind: output, shape index: {}]
  %s3 = sld [smem:[#allocation0]]
  $region22: #{tpu_custom_call.1} parent=0
    _
  %s5 = ssub.s32 1, %s3
  %s6 = scalar_select 0, %s5, %s3
  $region1: #{tpu_custom_call.1} parent=0
    #allocation2 [shape = 'u8[4096]{0}', space=vmem, size = 0x1000, scoped, tag = 'input window, operand 0, single buffered']
    #allocation3 [shape = 's32[1]{0}', space=sflag, size = 0x4, scoped, tag = 'scoped memory for tpu_custom_call.1']
    #allocation4 [shape = 's32[1]{0}', space=sflag, size = 0x4, scoped, tag = 'scoped memory for tpu_custom_call.1']
    #allocation5 [shape = 'u8[512]{0}', space=vmem, size = 0x400, scoped, tag = 'output window, operand 0, single buffered']
    %7 = vsyncpa [#allocation3], 0
    %8 = vsyncpa [#allocation4], 0
    // Predicated region
    $region2: #{tpu_custom_call.1} parent=1 // pred_check
      _
    $region3: #{tpu_custom_call.1} parent=1 // pred_check_branch
      %10 = sbr.rel (0) target = $region5
    $region4: #{tpu_custom_call.1} parent=1 // pred_region
      %s12 = ssub.s32 128, 128
      %13 = vsyncadd [#allocation3], %s12
      %s15 = sshll.u32 [#allocation2], 4
      %s16 = int_to_ptr.vmem [resolvable:$true] %s15
      %18 = dma.hbm_to_vmem [thread:$0]  %s0, 128, %s16, [#allocation3]
    $region5: #{tpu_custom_call.1} parent=1 // pred_fallthru
      _
    // Predicated region
    $region6: #{tpu_custom_call.1} parent=1 // pred_check
      _
    $region7: #{tpu_custom_call.1} parent=1 // pred_check_branch
      %20 = sbr.rel (0) target = $region9
    $region8: #{tpu_custom_call.1} parent=1 // pred_region
      _
    $region9: #{tpu_custom_call.1} parent=1 // pred_fallthru
      _
    // Predicated region
    $region10: #{tpu_custom_call.1} parent=1 // pred_check
      _
    $region11: #{tpu_custom_call.1} parent=1 // pred_check_branch
      %22 = sbr.rel (0) target = $region13
    $region12: #{tpu_custom_call.1} parent=1 // pred_region
      %23 = dma.done [#allocation3], 128
    $region13: #{tpu_custom_call.1} parent=1 // pred_fallthru
      _
    %v24 = vld [vmem:[#allocation2] sm:$0xff]
    %v25 = vmul.f32 %v24, %v24
    %vm26 = vcmask 261120
    %v28 = vsel %vm26, 1.0, 0
    %v31 = vsel %vm26, %v25, 0
    %33 = vmatprep.subr.mxu0 0.0
    %34 = vmatpush1.xpose.msra.mxu0 %v31
    %35 = vmatprep.subr.mxu0 0.0
    %36 = vmatpush1.xpose.msra.mxu0 0.0
    %37 = vmatprep.subr.mxu0 0.0
    %38 = vmatpush1.xpose.msra.mxu0 0.0
    %39 = vmatprep.subr.mxu0 0.0
    %40 = vmatpush1.xpose.msra.mxu0 0.0
    %41 = vmatprep.subr.mxu0 0.0
    %42 = vmatpush1.xpose.msra.mxu0 0.0
    %43 = vmatprep.subr.mxu0 0.0
    %44 = vmatpush1.xpose.msra.mxu0 0.0
    %45 = vmatprep.subr.mxu0 0.0
    %46 = vmatpush1.xpose.msra.mxu0 0.0
    %47 = vmatprep.subr.mxu0 0.0
    %48 = vmatpush1.xpose.msra.mxu0 0.0
    %49 = vmatprep.subr.mxu0 0.0
    %50 = vmatpush1.xpose.msra.mxu0 0.0
    %51 = vmatprep.subr.mxu0 0.0
    %52 = vmatpush1.xpose.msra.mxu0 0.0
    %53 = vmatprep.subr.mxu0 0.0
    %54 = vmatpush1.xpose.msra.mxu0 0.0
    %55 = vmatprep.subr.mxu0 0.0
    %56 = vmatpush1.xpose.msra.mxu0 0.0
    %57 = vmatprep.subr.mxu0 0.0
    %58 = vmatpush1.xpose.msra.mxu0 0.0
    %59 = vmatprep.subr.mxu0 0.0
    %60 = vmatpush1.xpose.msra.mxu0 0.0
    %61 = vmatprep.subr.mxu0 0.0
    %62 = vmatpush1.xpose.msra.mxu0 0.0
    %63 = vmatprep.subr.mxu0 0.0
    %64 = vmatpush1.xpose.msra.mxu0 0.0
    %65 = vmatprep.subr.mxu0 0.0
    %66 = vmatpush1.xpose.msra.mxu0 0.0
    %67 = vmatprep.subr.mxu0 0.0
    %68 = vmatpush1.xpose.msra.mxu0 0.0
    %69 = vmatprep.subr.mxu0 0.0
    %70 = vmatpush1.xpose.msra.mxu0 0.0
    %71 = vmatprep.subr.mxu0 0.0
    %72 = vmatpush1.xpose.msra.mxu0 0.0
    %73 = vmatprep.subr.mxu0 0.0
    %74 = vmatpush1.xpose.msra.mxu0 0.0
    %75 = vmatprep.subr.mxu0 0.0
    %76 = vmatpush1.xpose.msra.mxu0 0.0
    %77 = vmatprep.subr.mxu0 0.0
    %78 = vmatpush1.xpose.msra.mxu0 0.0
    %79 = vmatprep.subr.mxu0 0.0
    %80 = vmatpush1.xpose.msra.mxu0 0.0
    %81 = vmatprep.subr.mxu0 0.0
    %82 = vmatpush1.xpose.msra.mxu0 0.0
    %83 = vmatprep.subr.mxu0 0.0
    %84 = vmatpush1.xpose.msra.mxu0 0.0
    %85 = vmatprep.subr.mxu0 0.0
    %86 = vmatpush1.xpose.msra.mxu0 0.0
    %87 = vmatprep.subr.mxu0 0.0
    %88 = vmatpush1.xpose.msra.mxu0 0.0
    %89 = vmatprep.subr.mxu0 0.0
    %90 = vmatpush1.xpose.msra.mxu0 0.0
    %91 = vmatprep.subr.mxu0 0.0
    %92 = vmatpush1.xpose.msra.mxu0 0.0
    %93 = vmatprep.subr.mxu0 0.0
    %94 = vmatpush1.xpose.msra.mxu0 0.0
    %95 = vmatprep.subr.mxu0 0.0
    %96 = vmatpush1.xpose.msra.mxu0 0.0
    %97 = vmatprep.mubr.f32.mxu0 0.0
    %98 = vmatmul.mubr.f32.gmra.mrb[0].mxu0 %v28
    %v99 = vpop.f32.mrb[0].mxu0
    %v100 = vadd.f32 0.0, %v99
    %v101 = vpop.f32.mrb[0].mxu0
    %102 = vdwg.mxu0
    %v103 = vrsqrt.pop %v100
    %v104 = vmul.f32 %v100, %v103
    %vm105 = vcmp.eq.f32.partialorder %v100, inf
    %v106 = vsel %vm105, %v100, %v104
    %vm107 = vcmp.eq.f32.partialorder %v100, 0.0
    %v108 = vand.u32 %v100, 2147483648
    %v109 = vsel %vm107, %v108, %v106
    %v110 = vsub.f32 10.0, %v109
    %v111 = vmax.f32 %v110, 0.0
    %v112 = vld [vmem:[%s1] sm:$0x1]
    %vm113 = vcmp.ge.s32.totalorder %v112, 0
    %v114 = vmul.f32 %v111, %v111
    %v115 = vsel %vm113, %v114, %v100
    %vm116 = vcmask 57344
    %117 = vst.msk [vmem:[#allocation5] sm:$0x1] %vm116, %v115
    // Predicated region
    $region14: #{tpu_custom_call.1} parent=1 // pred_check
      _
    $region15: #{tpu_custom_call.1} parent=1 // pred_check_branch
      %119 = sbr.rel (0) target = $region17
    $region16: #{tpu_custom_call.1} parent=1 // pred_region
      %s121 = ssub.s32 16, 16
      %122 = vsyncadd [#allocation4], %s121
      %s124 = sshll.u32 [#allocation5], 4
      %s125 = int_to_ptr.vmem [resolvable:$true] %s124
      %127 = dma.vmem_to_hbm [thread:$0]  %s125, 16, %s2, [#allocation4]
    $region17: #{tpu_custom_call.1} parent=1 // pred_fallthru
      _
    // Predicated region
    $region18: #{tpu_custom_call.1} parent=1 // pred_check
      _
    $region19: #{tpu_custom_call.1} parent=1 // pred_check_branch
      %129 = sbr.rel (0) target = $region21
    $region20: #{tpu_custom_call.1} parent=1 // pred_region
      %130 = dma.done [#allocation4], 16
    $region21: #{tpu_custom_call.1} parent=1 // pred_fallthru
      _
    %131 = vsyncpa [#allocation3], 1
    %132 = vsyncpa [#allocation4], 1

</llo_original>
